<compile_context>
chip_gen: v6e
topology: v6e:2x2x1
jax: 0.10.0
libtpu: 0.0.40
codegen_flags: <defaults>
</compile_context>

<pallas_src>
import jax
import jax.numpy as jnp
from jax.experimental import pallas as pl
from jax.experimental.pallas import tpu as pltpu

_LANE = 128                    # TPU lane width
_MAX_COLS = 1024               # lane-dense slab width target (multiple of 128)
_SUBLANE_MULT = 32             # covers f32(8)/bf16(16)/int8(32) sublane packing
_TARGET_TILE_BYTES = 4 << 20   # ~4 MiB per pipeline buffer
_VMEM_LIMIT_BYTES = 40 << 20   # 4 buffers x 4 MiB = 16 MiB << 40 MiB << 64 MiB phys
_MIN_GRID_STEPS = 4            # >= 2 tiles per TensorCore on v7x (2 TCs/chip)
_PALLAS_MIN_BYTES = 1 << 20    # below this, XLA fusion beats kernel launch cost


def _relu_kernel(x_ref, o_ref):
    # Elementwise ReLU on the whole VMEM tile (single VPU max per vreg).
    o_ref[...] = jnp.maximum(x_ref[...], jnp.zeros((), x_ref.dtype))


def _pick_cols(n: int):
    """Largest multiple of 128 (<= _MAX_COLS) that divides n, else None."""
    c = min(_MAX_COLS, (n // _LANE) * _LANE)
    while c >= _LANE:
        if n % c == 0:
            return c
        c -= _LANE
    return None


def _pick_tile_rows(rows: int, cols: int, itemsize: int) -> int:
    """Row-tile size from a byte budget, rounded to a multiple of 32, with a
    cap that guarantees >= _MIN_GRID_STEPS grid steps for mid-size inputs."""
    row_bytes = cols * itemsize
    budget = max(_SUBLANE_MULT, _TARGET_TILE_BYTES // row_bytes)
    budget = (budget // _SUBLANE_MULT) * _SUBLANE_MULT

    if rows < _SUBLANE_MULT * _MIN_GRID_STEPS:
        # Small row extent: one full-extent block (always a legal block shape).
        return rows

    tile_r = min(budget, rows)
    # Ensure the "parallel" grid axis has at least _MIN_GRID_STEPS tiles so
    # megacore sharding (v7x: 2 TCs/chip) has work to distribute.
    cap = max(_SUBLANE_MULT,
              ((rows // _MIN_GRID_STEPS) // _SUBLANE_MULT) * _SUBLANE_MULT)
    tile_r = min(tile_r, cap)
    return tile_r if tile_r < rows else rows


def relu_pallas(x: jax.Array, *, force_pallas: bool = False,
                donate_input: bool = False) -> jax.Array:
    """ReLU over an arbitrarily-shaped array using a tiled Pallas TPU kernel."""
    orig_shape = x.shape
    dtype = x.dtype
    n = x.size

    if n == 0:
        return x

    itemsize = jnp.dtype(dtype).itemsize
    cols = _pick_cols(n) if (n % _LANE == 0) else None

    if cols is None:
        # No lane-dense 2-D view exists (n not a multiple of 128).  Padding +
        # slicing would round-trip the whole tensor through HBM twice more for
        # a purely bandwidth-bound op, so use XLA's fused elementwise ReLU.
        return jnp.maximum(x, jnp.zeros((), dtype))

    # Tiny tensors: per-step overhead (~0.35 us) + custom-call launch dominate;
    # a fused XLA elementwise op is strictly faster.
    if not force_pallas and n * itemsize < _PALLAS_MIN_BYTES:
        return jnp.maximum(x, jnp.zeros((), dtype))

    # --- Lane-dense 2-D slab (ReLU is pointwise, any reshape is legal) ------
    rows = n // cols
    x2 = x.reshape(rows, cols)

    # --- Row-tiled, pipelined grid (byte-budgeted tiles) ---------------------
    tile_r = _pick_tile_rows(rows, cols, itemsize)
    grid = (pl.cdiv(rows, tile_r),)   # ragged last block handled by masking

    out2 = pl.pallas_call(
        _relu_kernel,
        out_shape=jax.ShapeDtypeStruct((rows, cols), dtype),
        grid_spec=pltpu.PrefetchScalarGridSpec(
            num_scalar_prefetch=0,
            grid=grid,
            in_specs=[pl.BlockSpec((tile_r, cols), lambda i: (i, 0))],
            out_specs=pl.BlockSpec((tile_r, cols), lambda i: (i, 0)),
        ),
        compiler_params=pltpu.CompilerParams(
            dimension_semantics=("parallel",),   # independent row tiles
            vmem_limit_bytes=_VMEM_LIMIT_BYTES,  # room for 4 x 4 MiB buffers
        ),
        cost_estimate=pl.CostEstimate(
            flops=n, transcendentals=0, bytes_accessed=2 * n * itemsize),
        input_output_aliases={0: 0} if donate_input else {},
    )(x2)

    return out2.reshape(orig_shape)


if __name__ == "__main__":
    key = jax.random.PRNGKey(0)
    k1, k2, k3, k4 = jax.random.split(key, 4)

    # 1) Small NCHW input matching the module spec, forced through the Pallas
    #    path (2048 elems -> lane-dense (2, 1024) slab, single grid step).
    x_small = jax.random.normal(k1, (2, 4, 16, 16), dtype=jnp.float32)
    y_small = relu_pallas(x_small, force_pallas=True)
    jax.block_until_ready(y_small)
    ref_small = jnp.maximum(x_small, 0.0)
    assert y_small.shape == x_small.shape and y_small.dtype == x_small.dtype
    assert bool(jnp.all(y_small == ref_small))

    # 2) Larger activation: lane-dense (1024, 1024) slab split into 4 row
    #    tiles (>= _MIN_GRID_STEPS) so the "parallel" axis can shard across
    #    TensorCores.
    x_big = jax.random.normal(k2, (8, 16, 64, 128), dtype=jnp.float32)
    y_big = relu_pallas(x_big)
    jax.block_until_ready(y_big)
    ref_big = jnp.maximum(x_big, 0.0)
    assert y_big.shape == x_big.shape and y_big.dtype == x_big.dtype
    assert bool(jnp.all(y_big == ref_big))

    # 3) bf16 input (forced): exercises the 32-row-multiple tiling so sublane
    #    packing for low-precision dtypes keeps a legal, pipelined grid.
    x_bf16 = jax.random.normal(k3, (4, 8, 64, 128), dtype=jnp.bfloat16)
    y_bf16 = relu_pallas(x_bf16, force_pallas=True)
    jax.block_until_ready(y_bf16)
    ref_bf16 = jnp.maximum(x_bf16, jnp.zeros((), jnp.bfloat16))
    assert y_bf16.shape == x_bf16.shape and y_bf16.dtype == x_bf16.dtype
    assert bool(jnp.all(y_bf16 == ref_bf16))

    # 4) Awkward size (not a multiple of 128): takes the fused-XLA fallback
    #    (no pad/slice HBM round-trips), still matching the reference.
    x_odd = jax.random.normal(k4, (3, 5, 7), dtype=jnp.float32)
    y_odd = relu_pallas(x_odd)
    jax.block_until_ready(y_odd)
    assert bool(jnp.all(y_odd == jnp.maximum(x_odd, 0.0)))

    print("KERNEL_OK")
</pallas_src>

<mosaic_0001>
module attributes {stable_mosaic.version = 11 : i64} {
  func.func @_relu_kernel(%arg0: i32, %arg1: memref<2x1024xf32, #tpu.memory_space<vmem>>, %arg2: memref<2x1024xf32, #tpu.memory_space<vmem>>) attributes {dimension_semantics = [#tpu.dimension_semantics<parallel>], iteration_bounds = array<i64: 1>, scalar_prefetch = 0 : i64, scratch_operands = 0 : i64, tpu.core_type = #tpu.core_type<tc>, window_params = [{transform_indices = @transform_0, window_bounds = array<i64: 2, 1024>}, {transform_indices = @transform_1, window_bounds = array<i64: 2, 1024>}]} {
    %c0 = arith.constant 0 : index
    %c0_0 = arith.constant 0 : index
    %0 = vector.load %arg1[%c0, %c0_0] : memref<2x1024xf32, #tpu.memory_space<vmem>>, vector<2x1024xf32>
    %cst = arith.constant 0.000000e+00 : f32
    %1 = vector.broadcast %cst : f32 to vector<2x1024xf32>
    %2 = arith.maximumf %0, %1 : vector<2x1024xf32>
    %c0_1 = arith.constant 0 : index
    %c0_2 = arith.constant 0 : index
    %3 = vector.load %arg2[%c0_1, %c0_2] : memref<2x1024xf32, #tpu.memory_space<vmem>>, vector<2x1024xf32>
    tpu.vector_store %arg2[%c0_1, %c0_2], %2 {strides = array<i32>} : memref<2x1024xf32, #tpu.memory_space<vmem>>, vector<2x1024xf32>,
    return
  }
  func.func @transform_0(%arg0: i32) -> (i32, i32) {
    %c0_i32 = arith.constant 0 : i32
    %c0_i32_0 = arith.constant 0 : i32
    return %arg0, %c0_i32 : i32, i32
  }
  func.func @transform_1(%arg0: i32) -> (i32, i32) {
    %c0_i32 = arith.constant 0 : i32
    %c0_i32_0 = arith.constant 0 : i32
    return %arg0, %c0_i32 : i32, i32
  }
}

</mosaic_0001>

<llo_original>
// kernel: tpu_custom_call.1
$region0: #{tpu_custom_call.1}
  #allocation0 [shape = 'u32[]', space=smem, size = 0x4, offset = 0x4, fixed_abs, tag = 'smem constant byte address 0x4 - core index']
  #allocation1 [shape = 'u32[144,128]{1,0:T(1,128)}', space=vmem, size = 0x12000, scoped, tag = 'internal scratch']
  %s0 = inlined_call_operand.hbm [shape: f32[2,1024], index: 0, kind: input, shape index: {}]
  %s1 = inlined_call_operand.hbm [shape: f32[2,1024], index: 1, kind: output, shape index: {}]
  %s2 = sld [smem:[#allocation0]]
  $region18: #{tpu_custom_call.1} parent=0
    _
  %s4 = ssub.s32 1, %s2
  %s5 = scalar_select 0, %s4, %s2
  $region1: #{tpu_custom_call.1} parent=0
    #allocation2 [shape = 'u8[8192]{0}', space=vmem, size = 0x2000, scoped, tag = 'input window, operand 0, single buffered']
    #allocation3 [shape = 's32[1]{0}', space=sflag, size = 0x4, scoped, tag = 'scoped memory for tpu_custom_call.1']
    #allocation4 [shape = 's32[1]{0}', space=sflag, size = 0x4, scoped, tag = 'scoped memory for tpu_custom_call.1']
    #allocation5 [shape = 'u8[8192]{0}', space=vmem, size = 0x2000, scoped, tag = 'output window, operand 0, single buffered']
    %6 = vsyncpa [#allocation3], 0
    %7 = vsyncpa [#allocation4], 0
    // Predicated region
    $region2: #{tpu_custom_call.1} parent=1 // pred_check
      _
    $region3: #{tpu_custom_call.1} parent=1 // pred_check_branch
      %9 = sbr.rel (0) target = $region5
    $region4: #{tpu_custom_call.1} parent=1 // pred_region
      %s11 = ssub.s32 256, 256
      %12 = vsyncadd [#allocation3], %s11
      %s14 = sshll.u32 [#allocation2], 4
      %s15 = int_to_ptr.vmem [resolvable:$true] %s14
      %17 = dma.hbm_to_vmem [thread:$0]  %s0, 256, %s15, [#allocation3]
    $region5: #{tpu_custom_call.1} parent=1 // pred_fallthru
      _
    // Predicated region
    $region6: #{tpu_custom_call.1} parent=1 // pred_check
      _
    $region7: #{tpu_custom_call.1} parent=1 // pred_check_branch
      %19 = sbr.rel (0) target = $region9
    $region8: #{tpu_custom_call.1} parent=1 // pred_region
      %20 = dma.done [#allocation3], 256
    $region9: #{tpu_custom_call.1} parent=1 // pred_fallthru
      _
    %v21 = vld [vmem:[#allocation2] sm:$0xff]
    %v22 = vld [vmem:[#allocation2 + $0x8] sm:$0xff]
    %v23 = vmax.f32 %v21, 0.0
    %v24 = vmax.f32 %v22, 0.0
    %25 = vst [vmem:[#allocation5] sm:$0xff] %v23
    %26 = vst [vmem:[#allocation5 + $0x8] sm:$0xff] %v24
    // Predicated region
    $region10: #{tpu_custom_call.1} parent=1 // pred_check
      _
    $region11: #{tpu_custom_call.1} parent=1 // pred_check_branch
      %28 = sbr.rel (0) target = $region13
    $region12: #{tpu_custom_call.1} parent=1 // pred_region
      %s30 = ssub.s32 256, 256
      %31 = vsyncadd [#allocation4], %s30
      %s33 = sshll.u32 [#allocation5], 4
      %s34 = int_to_ptr.vmem [resolvable:$true] %s33
      %36 = dma.vmem_to_hbm [thread:$0]  %s34, 256, %s1, [#allocation4]
    $region13: #{tpu_custom_call.1} parent=1 // pred_fallthru
      _
    // Predicated region
    $region14: #{tpu_custom_call.1} parent=1 // pred_check
      _
    $region15: #{tpu_custom_call.1} parent=1 // pred_check_branch
      %38 = sbr.rel (0) target = $region17
    $region16: #{tpu_custom_call.1} parent=1 // pred_region
      %39 = dma.done [#allocation4], 256
    $region17: #{tpu_custom_call.1} parent=1 // pred_fallthru
      _
    %40 = vsyncpa [#allocation3], 1
    %41 = vsyncpa [#allocation4], 1

</llo_original>
